<compile_context>
chip_gen: v7x
topology: tpu7x:2x2x1
jax: 0.10.0
libtpu: 0.0.40
codegen_flags: <defaults>
</compile_context>

<pallas_src>
import functools

import jax
import jax.numpy as jnp
from jax.experimental import pallas as pl
from jax.experimental.pallas import tpu as pltpu


F_PAD = 128      # lane-dense padded feature width
BN_EPS = 1e-5


def _round_up(x, m):
    return (x + m - 1) // m * m


# ---------------------------------------------------------------------------
# Fused Pallas kernel: the entire GCN forward.
#   a_ref : (N_pad, N_pad)  bf16   dense normalized adjacency (resident)
#   x_ref : (N_pad, F_PAD)  bf16   padded node features
#   w_ref : (L, F_PAD, F_PAD) bf16 per-layer weights, BN scale pre-folded
#   s_ref : (L, 1, F_PAD)   f32    per-layer shift (conv bias + BN shift folded)
#   o_ref : (N_pad, F_PAD)  f32    output
# ---------------------------------------------------------------------------
def _gcn_fused_kernel(a_ref, x_ref, w_ref, s_ref, o_ref, *, num_layers):
    a = a_ref[...]                       # stays resident for all layers
    h = x_ref[...]                       # bf16 running activation
    out = None
    # Static Python loop is fine at 3 layers; switch to lax.fori_loop(unroll=True)
    # over the stacked weights if num_layers grows past ~8 (vreg pressure).
    for i in range(num_layers):
        w = w_ref[i]                     # (F_PAD, F_PAD) bf16
        shift = s_ref[i]                 # (1, F_PAD) f32
        xw = jnp.dot(h, w, preferred_element_type=jnp.float32)            # MXU bf16
        hw = jnp.dot(a, xw.astype(jnp.bfloat16),
                     preferred_element_type=jnp.float32)                  # MXU bf16
        hw = hw + shift
        if i < num_layers - 1:
            h = jnp.maximum(hw, 0.0).astype(jnp.bfloat16)   # ReLU; dropout = id (eval)
        else:
            out = hw
    o_ref[...] = out.astype(o_ref.dtype)


# ---------------------------------------------------------------------------
# One-time preparation (NOT on the per-forward path): fold BN + bias into the
# weights, pad/stack to lane-dense bf16, build dense normalized adjacency.
# ---------------------------------------------------------------------------
def normalized_adjacency(edge_index, num_nodes):
    """D^{-1/2} (A + I) D^{-1/2}, scatter-add like PyG message passing."""
    src, dst = edge_index[0], edge_index[1]
    a = jnp.zeros((num_nodes, num_nodes), jnp.float32)
    a = a.at[dst, src].add(1.0)                        # message src -> dst
    a = a + jnp.eye(num_nodes, dtype=jnp.float32)      # add self loops
    deg = a.sum(axis=1)
    dinv = jax.lax.rsqrt(deg)
    return a * dinv[:, None] * dinv[None, :]


def prepare_gcn(params, edge_index, num_nodes):
    """Build all static kernel operands once (weights folded, padded, bf16)."""
    num_layers = len(params["convs"])
    n_pad = _round_up(max(num_nodes, 1), 128)          # sublane- and lane-dense

    a = normalized_adjacency(edge_index, num_nodes)
    a_pad = jnp.zeros((n_pad, n_pad), jnp.float32).at[:num_nodes, :num_nodes].set(a)
    a_pad = a_pad.astype(jnp.bfloat16)

    w_stack, s_stack = [], []
    for i in range(num_layers):
        w, b = params["convs"][i]
        if i < num_layers - 1:
            gamma, beta, rm, rv = params["bns"][i]
            scale = gamma * jax.lax.rsqrt(rv + BN_EPS)
            w_eff = w * scale[None, :]
            shift = b * scale + (beta - rm * scale)
        else:
            w_eff, shift = w, b
        f_in, f_out = w.shape
        w_pad = jnp.zeros((F_PAD, F_PAD), jnp.float32).at[:f_in, :f_out].set(w_eff)
        s_pad = jnp.zeros((1, F_PAD), jnp.float32).at[0, :f_out].set(shift)
        w_stack.append(w_pad.astype(jnp.bfloat16))
        s_stack.append(s_pad)

    return {
        "a_hat": a_pad,                                 # (n_pad, n_pad) bf16
        "w": jnp.stack(w_stack),                        # (L, 128, 128) bf16
        "shift": jnp.stack(s_stack),                    # (L, 1, 128) f32
        "num_layers": num_layers,
        "num_nodes": num_nodes,
        "n_pad": n_pad,
        "input_dim": params["convs"][0][0].shape[0],
        "output_dim": params["convs"][-1][0].shape[1],
    }


# ---------------------------------------------------------------------------
# Per-forward path: pad x, one fused pallas_call, slice padding off.
# ---------------------------------------------------------------------------
@functools.partial(
    jax.jit,
    static_argnames=("num_layers", "n_pad", "num_nodes", "input_dim", "output_dim"),
)
def _gcn_forward_impl(x, a_hat, w, shift, *, num_layers, n_pad, num_nodes,
                      input_dim, output_dim):
    x_pad = jnp.zeros((n_pad, F_PAD), jnp.bfloat16)
    x_pad = x_pad.at[:num_nodes, :input_dim].set(x.astype(jnp.bfloat16))

    # Explicit scoped-VMEM budget with headroom (physical: 64 MiB/TC on v7x).
    working_bytes = (a_hat.size + w.size + x_pad.size) * 2 \
        + (shift.size + n_pad * F_PAD) * 4
    vmem_limit = int(min(max(2 * working_bytes, 4 << 20), 96 << 20))

    vmem = pl.BlockSpec(memory_space=pltpu.MemorySpace.VMEM)
    kernel = functools.partial(_gcn_fused_kernel, num_layers=num_layers)
    out_pad = pl.pallas_call(
        kernel,
        out_shape=jax.ShapeDtypeStruct((n_pad, F_PAD), jnp.float32),
        in_specs=[vmem, vmem, vmem, vmem],
        out_specs=vmem,
        compiler_params=pltpu.CompilerParams(vmem_limit_bytes=vmem_limit),
    )(a_hat, x_pad, w, shift)

    return out_pad[:num_nodes, :output_dim]


def gcn_forward(x, prepared):
    return _gcn_forward_impl(
        x, prepared["a_hat"], prepared["w"], prepared["shift"],
        num_layers=prepared["num_layers"], n_pad=prepared["n_pad"],
        num_nodes=prepared["num_nodes"], input_dim=prepared["input_dim"],
        output_dim=prepared["output_dim"])


# ---------------------------------------------------------------------------
# Pure-JAX f32 reference (validates the bf16-operand kernel).
# ---------------------------------------------------------------------------
def gcn_reference(x, params, edge_index, num_nodes):
    a = normalized_adjacency(edge_index, num_nodes)
    h = x
    num_layers = len(params["convs"])
    for i in range(num_layers):
        w, b = params["convs"][i]
        h = a @ (h @ w) + b
        if i < num_layers - 1:
            gamma, beta, rm, rv = params["bns"][i]
            h = (h - rm) * (gamma * jax.lax.rsqrt(rv + BN_EPS)) + beta
            h = jnp.maximum(h, 0.0)
    return h


# ---------------------------------------------------------------------------
# Parameter construction (deterministic, synthetic)
# ---------------------------------------------------------------------------
def init_params(key, input_dim, hidden_dim, output_dim, num_layers):
    dims = [input_dim] + [hidden_dim] * (num_layers - 1) + [output_dim]
    convs, bns = [], []
    for i in range(num_layers):
        key, kw = jax.random.split(key)
        f_in, f_out = dims[i], dims[i + 1]
        w = jax.random.normal(kw, (f_in, f_out), jnp.float32) * (2.0 / (f_in + f_out)) ** 0.5
        b = jnp.zeros((f_out,), jnp.float32)
        convs.append((w, b))
    for _ in range(num_layers - 1):
        key, kg, kb, km, kv = jax.random.split(key, 5)
        gamma = 1.0 + 0.1 * jax.random.normal(kg, (hidden_dim,), jnp.float32)
        beta = 0.1 * jax.random.normal(kb, (hidden_dim,), jnp.float32)
        run_mean = 0.1 * jax.random.normal(km, (hidden_dim,), jnp.float32)
        run_var = jax.random.uniform(kv, (hidden_dim,), jnp.float32, 0.5, 1.5)
        bns.append((gamma, beta, run_mean, run_var))
    return {"convs": convs, "bns": bns}


if __name__ == "__main__":
    key = jax.random.PRNGKey(0)
    kx, kp = jax.random.split(key)

    # Small graph: 16 nodes on a bidirectional ring.
    num_nodes = 16
    input_dim, hidden_dim, output_dim, num_layers = 8, 32, 4, 3

    nodes = jnp.arange(num_nodes, dtype=jnp.int32)
    nxt = (nodes + 1) % num_nodes
    edge_index = jnp.stack([
        jnp.concatenate([nodes, nxt]),
        jnp.concatenate([nxt, nodes]),
    ])  # (2, 32)

    x = jax.random.normal(kx, (num_nodes, input_dim), jnp.float32)
    params = init_params(kp, input_dim, hidden_dim, output_dim, num_layers)

    # One-time prep (folding, padding, adjacency) — NOT on the forward path.
    prepared = prepare_gcn(params, edge_index, num_nodes)
    jax.block_until_ready(prepared["a_hat"])

    out = gcn_forward(x, prepared)
    jax.block_until_ready(out)
    assert out.shape == (num_nodes, output_dim)

    # Validate bf16-operand kernel against the f32 reference (loose tolerance).
    ref = gcn_reference(x, params, edge_index, num_nodes)
    max_err = float(jnp.max(jnp.abs(out - ref)))
    tol = 0.05 * (1.0 + float(jnp.max(jnp.abs(ref))))
    assert max_err < tol, f"bf16 kernel deviates from f32 reference: {max_err} > {tol}"

    print("KERNEL_OK")
</pallas_src>

<mosaic_0001>
module attributes {stable_mosaic.version = 11 : i64} {
  func.func @_gcn_fused_kernel(%arg0: memref<128x128xbf16, #tpu.memory_space<vmem>>, %arg1: memref<128x128xbf16, #tpu.memory_space<vmem>>, %arg2: memref<3x128x128xbf16, #tpu.memory_space<vmem>>, %arg3: memref<3x1x128xf32, #tpu.memory_space<vmem>>, %arg4: memref<128x128xf32, #tpu.memory_space<vmem>>) attributes {dimension_semantics = [], scalar_prefetch = 0 : i64, scratch_operands = 0 : i64, tpu.core_type = #tpu.core_type<tc>} {
    %c0 = arith.constant 0 : index
    %c0_0 = arith.constant 0 : index
    %0 = vector.load %arg0[%c0, %c0_0] : memref<128x128xbf16, #tpu.memory_space<vmem>>, vector<128x128xbf16>
    %c0_1 = arith.constant 0 : index
    %c0_2 = arith.constant 0 : index
    %1 = vector.load %arg1[%c0_1, %c0_2] : memref<128x128xbf16, #tpu.memory_space<vmem>>, vector<128x128xbf16>
    %c0_3 = arith.constant 0 : index
    %c0_4 = arith.constant 0 : index
    %c0_5 = arith.constant 0 : index
    %2 = vector.load %arg2[%c0_3, %c0_4, %c0_5] : memref<3x128x128xbf16, #tpu.memory_space<vmem>>, vector<1x128x128xbf16>
    %3 = vector.shape_cast %2 : vector<1x128x128xbf16> to vector<128x128xbf16>
    %c0_6 = arith.constant 0 : index
    %c0_7 = arith.constant 0 : index
    %c0_8 = arith.constant 0 : index
    %4 = vector.load %arg3[%c0_6, %c0_7, %c0_8] : memref<3x1x128xf32, #tpu.memory_space<vmem>>, vector<1x1x128xf32>
    %5 = vector.shape_cast %4 : vector<1x1x128xf32> to vector<1x128xf32>
    %cst = arith.constant dense<0.000000e+00> : vector<128x128xf32>
    %6 = tpu.matmul %1, %3, %cst {dimension_numbers = #tpu.dot_dimension_numbers<[1], [0], [0], [1], [0, 0, 1, 1], [], []>} : vector<128x128xbf16>, vector<128x128xbf16>, vector<128x128xf32> -> vector<128x128xf32>
    %7 = arith.truncf %6 : vector<128x128xf32> to vector<128x128xbf16>
    %cst_9 = arith.constant dense<0.000000e+00> : vector<128x128xf32>
    %8 = tpu.matmul %0, %7, %cst_9 {dimension_numbers = #tpu.dot_dimension_numbers<[1], [0], [0], [1], [0, 0, 1, 1], [], []>} : vector<128x128xbf16>, vector<128x128xbf16>, vector<128x128xf32> -> vector<128x128xf32>
    %9 = vector.broadcast %5 : vector<1x128xf32> to vector<128x128xf32>
    %10 = arith.addf %8, %9 : vector<128x128xf32>
    %cst_10 = arith.constant 0.000000e+00 : f32
    %11 = vector.broadcast %cst_10 : f32 to vector<128x128xf32>
    %12 = arith.maximumf %10, %11 : vector<128x128xf32>
    %13 = arith.truncf %12 : vector<128x128xf32> to vector<128x128xbf16>
    %c1 = arith.constant 1 : index
    %c0_11 = arith.constant 0 : index
    %c0_12 = arith.constant 0 : index
    %14 = vector.load %arg2[%c1, %c0_11, %c0_12] : memref<3x128x128xbf16, #tpu.memory_space<vmem>>, vector<1x128x128xbf16>
    %15 = vector.shape_cast %14 : vector<1x128x128xbf16> to vector<128x128xbf16>
    %c1_13 = arith.constant 1 : index
    %c0_14 = arith.constant 0 : index
    %c0_15 = arith.constant 0 : index
    %16 = vector.load %arg3[%c1_13, %c0_14, %c0_15] : memref<3x1x128xf32, #tpu.memory_space<vmem>>, vector<1x1x128xf32>
    %17 = vector.shape_cast %16 : vector<1x1x128xf32> to vector<1x128xf32>
    %cst_16 = arith.constant dense<0.000000e+00> : vector<128x128xf32>
    %18 = tpu.matmul %13, %15, %cst_16 {dimension_numbers = #tpu.dot_dimension_numbers<[1], [0], [0], [1], [0, 0, 1, 1], [], []>} : vector<128x128xbf16>, vector<128x128xbf16>, vector<128x128xf32> -> vector<128x128xf32>
    %19 = arith.truncf %18 : vector<128x128xf32> to vector<128x128xbf16>
    %cst_17 = arith.constant dense<0.000000e+00> : vector<128x128xf32>
    %20 = tpu.matmul %0, %19, %cst_17 {dimension_numbers = #tpu.dot_dimension_numbers<[1], [0], [0], [1], [0, 0, 1, 1], [], []>} : vector<128x128xbf16>, vector<128x128xbf16>, vector<128x128xf32> -> vector<128x128xf32>
    %21 = vector.broadcast %17 : vector<1x128xf32> to vector<128x128xf32>
    %22 = arith.addf %20, %21 : vector<128x128xf32>
    %cst_18 = arith.constant 0.000000e+00 : f32
    %23 = vector.broadcast %cst_18 : f32 to vector<128x128xf32>
    %24 = arith.maximumf %22, %23 : vector<128x128xf32>
    %25 = arith.truncf %24 : vector<128x128xf32> to vector<128x128xbf16>
    %c2 = arith.constant 2 : index
    %c0_19 = arith.constant 0 : index
    %c0_20 = arith.constant 0 : index
    %26 = vector.load %arg2[%c2, %c0_19, %c0_20] : memref<3x128x128xbf16, #tpu.memory_space<vmem>>, vector<1x128x128xbf16>
    %27 = vector.shape_cast %26 : vector<1x128x128xbf16> to vector<128x128xbf16>
    %c2_21 = arith.constant 2 : index
    %c0_22 = arith.constant 0 : index
    %c0_23 = arith.constant 0 : index
    %28 = vector.load %arg3[%c2_21, %c0_22, %c0_23] : memref<3x1x128xf32, #tpu.memory_space<vmem>>, vector<1x1x128xf32>
    %29 = vector.shape_cast %28 : vector<1x1x128xf32> to vector<1x128xf32>
    %cst_24 = arith.constant dense<0.000000e+00> : vector<128x128xf32>
    %30 = tpu.matmul %25, %27, %cst_24 {dimension_numbers = #tpu.dot_dimension_numbers<[1], [0], [0], [1], [0, 0, 1, 1], [], []>} : vector<128x128xbf16>, vector<128x128xbf16>, vector<128x128xf32> -> vector<128x128xf32>
    %31 = arith.truncf %30 : vector<128x128xf32> to vector<128x128xbf16>
    %cst_25 = arith.constant dense<0.000000e+00> : vector<128x128xf32>
    %32 = tpu.matmul %0, %31, %cst_25 {dimension_numbers = #tpu.dot_dimension_numbers<[1], [0], [0], [1], [0, 0, 1, 1], [], []>} : vector<128x128xbf16>, vector<128x128xbf16>, vector<128x128xf32> -> vector<128x128xf32>
    %33 = vector.broadcast %29 : vector<1x128xf32> to vector<128x128xf32>
    %34 = arith.addf %32, %33 : vector<128x128xf32>
    %c0_26 = arith.constant 0 : index
    %c0_27 = arith.constant 0 : index
    %35 = vector.load %arg4[%c0_26, %c0_27] : memref<128x128xf32, #tpu.memory_space<vmem>>, vector<128x128xf32>
    tpu.vector_store %arg4[%c0_26, %c0_27], %34 {strides = array<i32>} : memref<128x128xf32, #tpu.memory_space<vmem>>, vector<128x128xf32>,
    return
  }
}

</mosaic_0001>

<llo_original>
// kernel: _gcn_forward_impl.1
$region0: #{_gcn_forward_impl.1}
  #allocation0 [shape = 'u32[]', space=smem, size = 0x4, offset = 0x4, fixed_abs, tag = 'smem constant byte address 0x4 - core index']
  #allocation1 [shape = 'u32[144,128]{1,0:T(1,128)}', space=vmem, size = 0x12000, scoped, tag = 'internal scratch']
  %s0 = inlined_call_operand.vmem [shape: bf16[128,128], index: 0, kind: input, shape index: {}]
  %s1 = inlined_call_operand.vmem [shape: bf16[128,128], index: 1, kind: input, shape index: {}]
  %s2 = inlined_call_operand.hbm [shape: bf16[3,128,128], index: 2, kind: input, shape index: {}]
  %s3 = inlined_call_operand.vmem [shape: f32[3,1,128], index: 3, kind: input, shape index: {}]
  %s4 = inlined_call_operand.vmem [shape: f32[128,128], index: 4, kind: output, shape index: {}]
  %s5 = sld [smem:[#allocation0]]
  $region30: #{_gcn_forward_impl.1} parent=0
    _
  %s7 = ssub.s32 1, %s5
  %s8 = scalar_select 0, %s7, %s5
  $region1: #{_gcn_forward_impl.1} parent=0
    #allocation2 [shape = 'u8[98304]{0}', space=vmem, size = 0x18000, scoped, tag = 'input window, operand 2, single buffered']
    #allocation3 [shape = 's32[1]{0}', space=sflag, size = 0x4, scoped, tag = 'scoped memory for _gcn_forward_impl.1']
    %9 = vsyncpa [#allocation3], 0
    // Predicated region
    $region2: #{_gcn_forward_impl.1} parent=1 // pred_check
      _
    $region3: #{_gcn_forward_impl.1} parent=1 // pred_check_branch
      %11 = sbr.rel (0) target = $region5
    $region4: #{_gcn_forward_impl.1} parent=1 // pred_region
      _
    $region5: #{_gcn_forward_impl.1} parent=1 // pred_fallthru
      _
    // Predicated region
    $region6: #{_gcn_forward_impl.1} parent=1 // pred_check
      _
    $region7: #{_gcn_forward_impl.1} parent=1 // pred_check_branch
      %13 = sbr.rel (0) target = $region9
    $region8: #{_gcn_forward_impl.1} parent=1 // pred_region
      _
    $region9: #{_gcn_forward_impl.1} parent=1 // pred_fallthru
      _
    // Predicated region
    $region10: #{_gcn_forward_impl.1} parent=1 // pred_check
      _
    $region11: #{_gcn_forward_impl.1} parent=1 // pred_check_branch
      %15 = sbr.rel (0) target = $region13
    $region12: #{_gcn_forward_impl.1} parent=1 // pred_region
      %s17 = ssub.s32 3072, 3072
      %18 = vsyncadd [#allocation3], %s17
      %s19 = sshll.u32 [#allocation2], 4
      %s20 = int_to_ptr.vmem [resolvable:$true] %s19
      %25 = dma.hbm_to_vmem [thread:$0]  %s2, 3072, %s20, [#allocation3], 64, 64, 4
    $region13: #{_gcn_forward_impl.1} parent=1 // pred_fallthru
      _
    // Predicated region
    $region14: #{_gcn_forward_impl.1} parent=1 // pred_check
      _
    $region15: #{_gcn_forward_impl.1} parent=1 // pred_check_branch
      %27 = sbr.rel (0) target = $region17
    $region16: #{_gcn_forward_impl.1} parent=1 // pred_region
      _
    $region17: #{_gcn_forward_impl.1} parent=1 // pred_fallthru
      _
    // Predicated region
    $region18: #{_gcn_forward_impl.1} parent=1 // pred_check
      _
    $region19: #{_gcn_forward_impl.1} parent=1 // pred_check_branch
      %29 = sbr.rel (0) target = $region21
    $region20: #{_gcn_forward_impl.1} parent=1 // pred_region
      %30 = dma.done [#allocation3], 3072
    $region21: #{_gcn_forward_impl.1} parent=1 // pred_fallthru
      _
    %v32 = vld [vmem:[%s0] sm:$0xf]
    %v33 = vld [vmem:[%s0 + $0x4] sm:$0xf]
    %v34 = vld [vmem:[%s0 + $0x8] sm:$0xf]
    %v35 = vld [vmem:[%s0 + $0xc] sm:$0xf]
    %v36 = vld [vmem:[%s0 + $0x10] sm:$0xf]
    %v37 = vld [vmem:[%s0 + $0x14] sm:$0xf]
    %v38 = vld [vmem:[%s0 + $0x18] sm:$0xf]
    %v39 = vld [vmem:[%s0 + $0x1c] sm:$0xf]
    %v40 = vld [vmem:[%s0 + $0x20] sm:$0xf]
    %v41 = vld [vmem:[%s0 + $0x24] sm:$0xf]
    %v42 = vld [vmem:[%s0 + $0x28] sm:$0xf]
    %v43 = vld [vmem:[%s0 + $0x2c] sm:$0xf]
    %v44 = vld [vmem:[%s0 + $0x30] sm:$0xf]
    %v45 = vld [vmem:[%s0 + $0x34] sm:$0xf]
    %v46 = vld [vmem:[%s0 + $0x38] sm:$0xf]
    %v47 = vld [vmem:[%s0 + $0x3c] sm:$0xf]
    %v48 = vld [vmem:[%s1] sm:$0xf]
    %v49 = vld [vmem:[%s1 + $0x4] sm:$0xf]
    %v50 = vld [vmem:[%s1 + $0x8] sm:$0xf]
    %v51 = vld [vmem:[%s1 + $0xc] sm:$0xf]
    %v52 = vld [vmem:[%s1 + $0x10] sm:$0xf]
    %v53 = vld [vmem:[%s1 + $0x14] sm:$0xf]
    %v54 = vld [vmem:[%s1 + $0x18] sm:$0xf]
    %v55 = vld [vmem:[%s1 + $0x1c] sm:$0xf]
    %v56 = vld [vmem:[%s1 + $0x20] sm:$0xf]
    %v57 = vld [vmem:[%s1 + $0x24] sm:$0xf]
    %v58 = vld [vmem:[%s1 + $0x28] sm:$0xf]
    %v59 = vld [vmem:[%s1 + $0x2c] sm:$0xf]
    %v60 = vld [vmem:[%s1 + $0x30] sm:$0xf]
    %v61 = vld [vmem:[%s1 + $0x34] sm:$0xf]
    %v62 = vld [vmem:[%s1 + $0x38] sm:$0xf]
    %v63 = vld [vmem:[%s1 + $0x3c] sm:$0xf]
    %v64 = vld [vmem:[#allocation2] sm:$0xf]
    %v65 = vld [vmem:[#allocation2 + $0x4] sm:$0xf]
    %v66 = vld [vmem:[#allocation2 + $0x8] sm:$0xf]
    %v67 = vld [vmem:[#allocation2 + $0xc] sm:$0xf]
    %v68 = vld [vmem:[#allocation2 + $0x10] sm:$0xf]
    %v69 = vld [vmem:[#allocation2 + $0x14] sm:$0xf]
    %v70 = vld [vmem:[#allocation2 + $0x18] sm:$0xf]
    %v71 = vld [vmem:[#allocation2 + $0x1c] sm:$0xf]
    %v72 = vld [vmem:[#allocation2 + $0x20] sm:$0xf]
    %v73 = vld [vmem:[#allocation2 + $0x24] sm:$0xf]
    %v74 = vld [vmem:[#allocation2 + $0x28] sm:$0xf]
    %v75 = vld [vmem:[#allocation2 + $0x2c] sm:$0xf]
    %v76 = vld [vmem:[#allocation2 + $0x30] sm:$0xf]
    %v77 = vld [vmem:[#allocation2 + $0x34] sm:$0xf]
    %v78 = vld [vmem:[#allocation2 + $0x38] sm:$0xf]
    %v79 = vld [vmem:[#allocation2 + $0x3c] sm:$0xf]
    %v80 = vld [vmem:[%s3] sm:$0x1]
    %v97 = vunpack.c.l.b16 %v48
    %v98 = vunpack.c.l.b16 %v49
    %v99 = vunpack.c.l.b16 %v50
    %v100 = vunpack.c.l.b16 %v51
    %v101 = vunpack.c.l.b16 %v52
    %v102 = vunpack.c.l.b16 %v53
    %v103 = vunpack.c.l.b16 %v54
    %v104 = vunpack.c.l.b16 %v55
    %v105 = vunpack.c.l.b16 %v56
    %v106 = vunpack.c.l.b16 %v57
    %v107 = vunpack.c.l.b16 %v58
    %v108 = vunpack.c.l.b16 %v59
    %v109 = vunpack.c.l.b16 %v60
    %v110 = vunpack.c.l.b16 %v61
    %v111 = vunpack.c.l.b16 %v62
    %v112 = vunpack.c.l.b16 %v63
    %v113 = vpack.c.b16 %v98, %v97
    %v114 = vpack.c.b16 %v100, %v99
    %v115 = vpack.c.b16 %v102, %v101
    %v116 = vpack.c.b16 %v104, %v103
    %v117 = vpack.c.b16 %v106, %v105
    %v118 = vpack.c.b16 %v108, %v107
    %v119 = vpack.c.b16 %v110, %v109
    %v120 = vpack.c.b16 %v112, %v111
    %v145 = vunpack.c.l.b16 %v64
    %v146 = vunpack.c.l.b16 %v65
    %v147 = vunpack.c.l.b16 %v66
    %v148 = vunpack.c.l.b16 %v67
    %v149 = vunpack.c.l.b16 %v68
    %v150 = vunpack.c.l.b16 %v69
    %v151 = vunpack.c.l.b16 %v70
    %v152 = vunpack.c.l.b16 %v71
    %v153 = vunpack.c.l.b16 %v72
    %v154 = vunpack.c.l.b16 %v73
    %v155 = vunpack.c.l.b16 %v74
    %v156 = vunpack.c.l.b16 %v75
    %v157 = vunpack.c.l.b16 %v76
    %v158 = vunpack.c.l.b16 %v77
    %v159 = vunpack.c.l.b16 %v78
    %v160 = vunpack.c.l.b16 %v79
    %v161 = vpack.c.b16 %v146, %v145
    %v162 = vpack.c.b16 %v148, %v147
    %v163 = vpack.c.b16 %v150, %v149
    %v164 = vpack.c.b16 %v152, %v151
    %v165 = vpack.c.b16 %v154, %v153
    %v166 = vpack.c.b16 %v156, %v155
    %v167 = vpack.c.b16 %v158, %v157
    %v168 = vpack.c.b16 %v160, %v159
    %177 = vmatprep.subr.bf16.mxu0 0
    %178 = vmatpush1.bf16.msra.mxu0 %v161
    %179 = vmatprep.subr.bf16.mxu0 0
    %180 = vmatpush1.bf16.msra.mxu0 %v162
    %181 = vmatprep.subr.bf16.mxu0 0
    %182 = vmatpush1.bf16.msra.mxu0 %v163
    %183 = vmatprep.subr.bf16.mxu0 0
    %184 = vmatpush1.bf16.msra.mxu0 %v164
    %185 = vmatprep.subr.bf16.mxu0 0
    %186 = vmatpush1.bf16.msra.mxu0 %v165
    %187 = vmatprep.subr.bf16.mxu0 0
    %188 = vmatpush1.bf16.msra.mxu0 %v166
    %189 = vmatprep.subr.bf16.mxu0 0
    %190 = vmatpush1.bf16.msra.mxu0 %v167
    %191 = vmatprep.subr.bf16.mxu0 0
    %192 = vmatpush1.bf16.msra.mxu0 %v168
    %193 = vmatprep.subr.bf16.mxu0 0
    %194 = vmatpush1.bf16.msra.mxu0 0
    %195 = vmatprep.subr.bf16.mxu0 0
    %196 = vmatpush1.bf16.msra.mxu0 0
    %197 = vmatprep.subr.bf16.mxu0 0
    %198 = vmatpush1.bf16.msra.mxu0 0
    %199 = vmatprep.subr.bf16.mxu0 0
    %200 = vmatpush1.bf16.msra.mxu0 0
    %201 = vmatprep.subr.bf16.mxu0 0
    %202 = vmatpush1.bf16.msra.mxu0 0
    %203 = vmatprep.subr.bf16.mxu0 0
    %204 = vmatpush1.bf16.msra.mxu0 0
    %205 = vmatprep.subr.bf16.mxu0 0
    %206 = vmatpush1.bf16.msra.mxu0 0
    %207 = vmatprep.subr.bf16.mxu0 0
    %208 = vmatpush1.bf16.msra.mxu0 0
    %209 = vmatprep.mubr.bf16.mxu0 0
    %210 = vmatmul.mubr.bf16.gmra.mrb[0].mxu0 %v113
    %v211 = vpop.f32.mrb[0].mxu0
    %v212 = vadd.f32 0.0, %v211
    %v213 = vpop.f32.mrb[0].mxu0
    %v214 = vpop.f32.mrb[0].mxu0
    %v215 = vadd.f32 0.0, %v214
    %v216 = vpop.f32.mrb[0].mxu0
    %217 = vmatprep.mubr.bf16.mxu0 0
    %218 = vmatmul.mubr.bf16.gmra.mrb[0].mxu0 %v114
    %v219 = vpop.f32.mrb[0].mxu0
    %v220 = vadd.f32 0.0, %v219
    %v221 = vpop.f32.mrb[0].mxu0
    %v222 = vpop.f32.mrb[0].mxu0
    %v223 = vadd.f32 0.0, %v222
    %v224 = vpop.f32.mrb[0].mxu0
    %225 = vmatprep.mubr.bf16.mxu0 0
    %226 = vmatmul.mubr.bf16.gmra.mrb[0].mxu0 %v115
    %v227 = vpop.f32.mrb[0].mxu0
    %v228 = vadd.f32 0.0, %v227
    %v229 = vpop.f32.mrb[0].mxu0
    %v230 = vpop.f32.mrb[0].mxu0
    %v231 = vadd.f32 0.0, %v230
    %v232 = vpop.f32.mrb[0].mxu0
    %233 = vmatprep.mubr.bf16.mxu0 0
    %234 = vmatmul.mubr.bf16.gmra.mrb[0].mxu0 %v116
    %v235 = vpop.f32.mrb[0].mxu0
    %v236 = vadd.f32 0.0, %v235
    %v237 = vpop.f32.mrb[0].mxu0
    %v238 = vpop.f32.mrb[0].mxu0
    %v239 = vadd.f32 0.0, %v238
    %v240 = vpop.f32.mrb[0].mxu0
    %241 = vmatprep.mubr.bf16.mxu0 0
    %242 = vmatmul.mubr.bf16.gmra.mrb[0].mxu0 %v117
    %v243 = vpop.f32.mrb[0].mxu0
    %v244 = vadd.f32 0.0, %v243
    %v245 = vpop.f32.mrb[0].mxu0
    %v246 = vpop.f32.mrb[0].mxu0
    %v247 = vadd.f32 0.0, %v246
    %v248 = vpop.f32.mrb[0].mxu0
    %249 = vmatprep.mubr.bf16.mxu0 0
    %250 = vmatmul.mubr.bf16.gmra.mrb[0].mxu0 %v118
    %v251 = vpop.f32.mrb[0].mxu0
    %v252 = vadd.f32 0.0, %v251
    %v253 = vpop.f32.mrb[0].mxu0
    %v254 = vpop.f32.mrb[0].mxu0
    %v255 = vadd.f32 0.0, %v254
    %v256 = vpop.f32.mrb[0].mxu0
    %257 = vmatprep.mubr.bf16.mxu0 0
    %258 = vmatmul.mubr.bf16.gmra.mrb[0].mxu0 %v119
    %v259 = vpop.f32.mrb[0].mxu0
    %v260 = vadd.f32 0.0, %v259
    %v261 = vpop.f32.mrb[0].mxu0
    %v262 = vpop.f32.mrb[0].mxu0
    %v263 = vadd.f32 0.0, %v262
    %v264 = vpop.f32.mrb[0].mxu0
    %265 = vmatprep.mubr.bf16.mxu0 0
    %266 = vmatmul.mubr.bf16.gmra.mrb[0].mxu0 %v120
    %v267 = vpop.f32.mrb[0].mxu0
    %v268 = vadd.f32 0.0, %v267
    %v269 = vpop.f32.mrb[0].mxu0
    %v270 = vpop.f32.mrb[0].mxu0
    %v271 = vadd.f32 0.0, %v270
    %v272 = vpop.f32.mrb[0].mxu0
    %273 = vdwg.mxu0
    %v274 = vpack.c.bf16 %v215, %v212
    %v275 = vpack.c.bf16 %v223, %v220
    %v276 = vpack.c.bf16 %v231, %v228
    %v277 = vpack.c.bf16 %v239, %v236
    %v278 = vpack.c.bf16 %v247, %v244
    %v279 = vpack.c.bf16 %v255, %v252
    %v280 = vpack.c.bf16 %v263, %v260
    %v281 = vpack.c.bf16 %v271, %v268
    %v283 = vlaneseq
    %v284 = vshrl.u32 %v283, 7
    %v285 = vsub.s32 0, %v284
    %v286 = vrot.slane %v80, %v285
    %v304 = vunpack.c.l.b16 %v32
    %v305 = vunpack.c.l.b16 %v33
    %v306 = vunpack.c.l.b16 %v34
    %v307 = vunpack.c.l.b16 %v35
    %v308 = vunpack.c.l.b16 %v36
    %v309 = vunpack.c.l.b16 %v37
    %v310 = vunpack.c.l.b16 %v38
    %v311 = vunpack.c.l.b16 %v39
    %v312 = vunpack.c.l.b16 %v40
    %v313 = vunpack.c.l.b16 %v41
    %v314 = vunpack.c.l.b16 %v42
    %v315 = vunpack.c.l.b16 %v43
    %v316 = vunpack.c.l.b16 %v44
    %v317 = vunpack.c.l.b16 %v45
    %v318 = vunpack.c.l.b16 %v46
    %v319 = vunpack.c.l.b16 %v47
    %v320 = vpack.c.b16 %v305, %v304
    %v321 = vpack.c.b16 %v307, %v306
    %v322 = vpack.c.b16 %v309, %v308
    %v323 = vpack.c.b16 %v311, %v310
    %v324 = vpack.c.b16 %v313, %v312
    %v325 = vpack.c.b16 %v315, %v314
    %v326 = vpack.c.b16 %v317, %v316
    %v327 = vpack.c.b16 %v319, %v318
    %336 = vmatprep.subr.bf16.mxu0 0
    %337 = vmatpush1.bf16.msra.mxu0 %v274
    %338 = vmatprep.subr.bf16.mxu0 0
    %339 = vmatpush1.bf16.msra.mxu0 %v275
    %340 = vmatprep.subr.bf16.mxu0 0
    %341 = vmatpush1.bf16.msra.mxu0 %v276
    %342 = vmatprep.subr.bf16.mxu0 0
    %343 = vmatpush1.bf16.msra.mxu0 %v277
    %344 = vmatprep.subr.bf16.mxu0 0
    %345 = vmatpush1.bf16.msra.mxu0 %v278
    %346 = vmatprep.subr.bf16.mxu0 0
    %347 = vmatpush1.bf16.msra.mxu0 %v279
    %348 = vmatprep.subr.bf16.mxu0 0
    %349 = vmatpush1.bf16.msra.mxu0 %v280
    %350 = vmatprep.subr.bf16.mxu0 0
    %351 = vmatpush1.bf16.msra.mxu0 %v281
    %352 = vmatprep.subr.bf16.mxu0 0
    %353 = vmatpush1.bf16.msra.mxu0 0
    %354 = vmatprep.subr.bf16.mxu0 0
    %355 = vmatpush1.bf16.msra.mxu0 0
    %356 = vmatprep.subr.bf16.mxu0 0
    %357 = vmatpush1.bf16.msra.mxu0 0
    %358 = vmatprep.subr.bf16.mxu0 0
    %359 = vmatpush1.bf16.msra.mxu0 0
    %360 = vmatprep.subr.bf16.mxu0 0
    %361 = vmatpush1.bf16.msra.mxu0 0
    %362 = vmatprep.subr.bf16.mxu0 0
    %363 = vmatpush1.bf16.msra.mxu0 0
    %364 = vmatprep.subr.bf16.mxu0 0
    %365 = vmatpush1.bf16.msra.mxu0 0
    %366 = vmatprep.subr.bf16.mxu0 0
    %367 = vmatpush1.bf16.msra.mxu0 0
    %368 = vmatprep.mubr.bf16.mxu0 0
    %369 = vmatmul.mubr.bf16.gmra.mrb[0].mxu0 %v320
    %v370 = vpop.f32.mrb[0].mxu0
    %v371 = vadd.f32 %v286, %v370
    %v372 = vpop.f32.mrb[0].mxu0
    %v373 = vpop.f32.mrb[0].mxu0
    %v374 = vadd.f32 %v286, %v373
    %v375 = vpop.f32.mrb[0].mxu0
    %376 = vmatprep.mubr.bf16.mxu0 0
    %377 = vmatmul.mubr.bf16.gmra.mrb[0].mxu0 %v321
    %v378 = vpop.f32.mrb[0].mxu0
    %v379 = vadd.f32 %v286, %v378
    %v380 = vpop.f32.mrb[0].mxu0
    %v381 = vpop.f32.mrb[0].mxu0
    %v382 = vadd.f32 %v286, %v381
    %v383 = vpop.f32.mrb[0].mxu0
    %384 = vmatprep.mubr.bf16.mxu0 0
    %385 = vmatmul.mubr.bf16.gmra.mrb[0].mxu0 %v322
    %v386 = vpop.f32.mrb[0].mxu0
    %v387 = vadd.f32 %v286, %v386
    %v388 = vpop.f32.mrb[0].mxu0
    %v389 = vpop.f32.mrb[0].mxu0
    %v390 = vadd.f32 %v286, %v389
    %v391 = vpop.f32.mrb[0].mxu0
    %392 = vmatprep.mubr.bf16.mxu0 0
    %393 = vmatmul.mubr.bf16.gmra.mrb[0].mxu0 %v323
    %v394 = vpop.f32.mrb[0].mxu0
    %v395 = vadd.f32 %v286, %v394
    %v396 = vpop.f32.mrb[0].mxu0
    %v397 = vpop.f32.mrb[0].mxu0
    %v398 = vadd.f32 %v286, %v397
    %v399 = vpop.f32.mrb[0].mxu0
    %400 = vmatprep.mubr.bf16.mxu0 0
    %401 = vmatmul.mubr.bf16.gmra.mrb[0].mxu0 %v324
    %v402 = vpop.f32.mrb[0].mxu0
    %v403 = vadd.f32 %v286, %v402
    %v404 = vpop.f32.mrb[0].mxu0
    %v405 = vpop.f32.mrb[0].mxu0
    %v406 = vadd.f32 %v286, %v405
    %v407 = vpop.f32.mrb[0].mxu0
    %408 = vmatprep.mubr.bf16.mxu0 0
    %409 = vmatmul.mubr.bf16.gmra.mrb[0].mxu0 %v325
    %v410 = vpop.f32.mrb[0].mxu0
    %v411 = vadd.f32 %v286, %v410
    %v412 = vpop.f32.mrb[0].mxu0
    %v413 = vpop.f32.mrb[0].mxu0
    %v414 = vadd.f32 %v286, %v413
    %v415 = vpop.f32.mrb[0].mxu0
    %416 = vmatprep.mubr.bf16.mxu0 0
    %417 = vmatmul.mubr.bf16.gmra.mrb[0].mxu0 %v326
    %v418 = vpop.f32.mrb[0].mxu0
    %v419 = vadd.f32 %v286, %v418
    %v420 = vpop.f32.mrb[0].mxu0
    %v421 = vpop.f32.mrb[0].mxu0
    %v422 = vadd.f32 %v286, %v421
    %v423 = vpop.f32.mrb[0].mxu0
    %424 = vmatprep.mubr.bf16.mxu0 0
    %425 = vmatmul.mubr.bf16.gmra.mrb[0].mxu0 %v327
    %v426 = vpop.f32.mrb[0].mxu0
    %v427 = vadd.f32 %v286, %v426
    %v428 = vpop.f32.mrb[0].mxu0
    %v429 = vpop.f32.mrb[0].mxu0
    %v430 = vadd.f32 %v286, %v429
    %v431 = vpop.f32.mrb[0].mxu0
    %432 = vdwg.mxu0
    %v433 = vmax.f32 %v371, 0.0
    %v434 = vmax.f32 %v374, 0.0
    %v435 = vmax.f32 %v379, 0.0
    %v436 = vmax.f32 %v382, 0.0
    %v437 = vmax.f32 %v387, 0.0
    %v438 = vmax.f32 %v390, 0.0
    %v439 = vmax.f32 %v395, 0.0
    %v440 = vmax.f32 %v398, 0.0
    %v441 = vmax.f32 %v403, 0.0
    %v442 = vmax.f32 %v406, 0.0
    %v443 = vmax.f32 %v411, 0.0
    %v444 = vmax.f32 %v414, 0.0
    %v445 = vmax.f32 %v419, 0.0
    %v446 = vmax.f32 %v422, 0.0
    %v447 = vmax.f32 %v427, 0.0
    %v448 = vmax.f32 %v430, 0.0
    %v449 = vpack.c.bf16 %v434, %v433
    %v450 = vpack.c.bf16 %v436, %v435
    %v451 = vpack.c.bf16 %v438, %v437
    %v452 = vpack.c.bf16 %v440, %v439
    %v453 = vpack.c.bf16 %v442, %v441
    %v454 = vpack.c.bf16 %v444, %v443
    %v455 = vpack.c.bf16 %v446, %v445
    %v456 = vpack.c.bf16 %v448, %v447
    %s457 = scalar_lea.vmem [#allocation2], 64
    %v458 = vld [vmem:[%s457] sm:$0xf]
    %v459 = vld [vmem:[%s457 + $0x4] sm:$0xf]
    %v460 = vld [vmem:[%s457 + $0x8] sm:$0xf]
    %v461 = vld [vmem:[%s457 + $0xc] sm:$0xf]
    %v462 = vld [vmem:[%s457 + $0x10] sm:$0xf]
    %v463 = vld [vmem:[%s457 + $0x14] sm:$0xf]
    %v464 = vld [vmem:[%s457 + $0x18] sm:$0xf]
    %v465 = vld [vmem:[%s457 + $0x1c] sm:$0xf]
    %v466 = vld [vmem:[%s457 + $0x20] sm:$0xf]
    %v467 = vld [vmem:[%s457 + $0x24] sm:$0xf]
    %v468 = vld [vmem:[%s457 + $0x28] sm:$0xf]
    %v469 = vld [vmem:[%s457 + $0x2c] sm:$0xf]
    %v470 = vld [vmem:[%s457 + $0x30] sm:$0xf]
    %v471 = vld [vmem:[%s457 + $0x34] sm:$0xf]
    %v472 = vld [vmem:[%s457 + $0x38] sm:$0xf]
    %v473 = vld [vmem:[%s457 + $0x3c] sm:$0xf]
    %s474 = scalar_lea.vmem %s3, 1
    %v475 = vld [vmem:[%s474] sm:$0x1]
    %v492 = vunpack.c.l.b16 %v458
    %v493 = vunpack.c.l.b16 %v459
    %v494 = vunpack.c.l.b16 %v460
    %v495 = vunpack.c.l.b16 %v461
    %v496 = vunpack.c.l.b16 %v462
    %v497 = vunpack.c.l.b16 %v463
    %v498 = vunpack.c.l.b16 %v464
    %v499 = vunpack.c.l.b16 %v465
    %v500 = vunpack.c.l.b16 %v466
    %v501 = vunpack.c.l.b16 %v467
    %v502 = vunpack.c.l.b16 %v468
    %v503 = vunpack.c.l.b16 %v469
    %v504 = vunpack.c.l.b16 %v470
    %v505 = vunpack.c.l.b16 %v471
    %v506 = vunpack.c.l.b16 %v472
    %v507 = vunpack.c.l.b16 %v473
    %v508 = vpack.c.b16 %v493, %v492
    %v509 = vpack.c.b16 %v495, %v494
    %v510 = vpack.c.b16 %v497, %v496
    %v511 = vpack.c.b16 %v499, %v498
    %v512 = vpack.c.b16 %v501, %v500
    %v513 = vpack.c.b16 %v503, %v502
    %v514 = vpack.c.b16 %v505, %v504
    %v515 = vpack.c.b16 %v507, %v506
    %524 = vmatprep.subr.bf16.mxu0 0
    %525 = vmatpush1.bf16.msra.mxu0 %v508
    %526 = vmatprep.subr.bf16.mxu0 0
    %527 = vmatpush1.bf16.msra.mxu0 %v509
    %528 = vmatprep.subr.bf16.mxu0 0
    %529 = vmatpush1.bf16.msra.mxu0 %v510
    %530 = vmatprep.subr.bf16.mxu0 0
    %531 = vmatpush1.bf16.msra.mxu0 %v511
    %532 = vmatprep.subr.bf16.mxu0 0
    %533 = vmatpush1.bf16.msra.mxu0 %v512
    %534 = vmatprep.subr.bf16.mxu0 0
    %535 = vmatpush1.bf16.msra.mxu0 %v513
    %536 = vmatprep.subr.bf16.mxu0 0
    %537 = vmatpush1.bf16.msra.mxu0 %v514
    %538 = vmatprep.subr.bf16.mxu0 0
    %539 = vmatpush1.bf16.msra.mxu0 %v515
    %540 = vmatprep.subr.bf16.mxu0 0
    %541 = vmatpush1.bf16.msra.mxu0 0
    %542 = vmatprep.subr.bf16.mxu0 0
    %543 = vmatpush1.bf16.msra.mxu0 0
    %544 = vmatprep.subr.bf16.mxu0 0
    %545 = vmatpush1.bf16.msra.mxu0 0
    %546 = vmatprep.subr.bf16.mxu0 0
    %547 = vmatpush1.bf16.msra.mxu0 0
    %548 = vmatprep.subr.bf16.mxu0 0
    %549 = vmatpush1.bf16.msra.mxu0 0
    %550 = vmatprep.subr.bf16.mxu0 0
    %551 = vmatpush1.bf16.msra.mxu0 0
    %552 = vmatprep.subr.bf16.mxu0 0
    %553 = vmatpush1.bf16.msra.mxu0 0
    %554 = vmatprep.subr.bf16.mxu0 0
    %555 = vmatpush1.bf16.msra.mxu0 0
    %556 = vmatprep.mubr.bf16.mxu0 0
    %557 = vmatmul.mubr.bf16.gmra.mrb[0].mxu0 %v449
    %v558 = vpop.f32.mrb[0].mxu0
    %v559 = vadd.f32 0.0, %v558
    %v560 = vpop.f32.mrb[0].mxu0
    %v561 = vpop.f32.mrb[0].mxu0
    %v562 = vadd.f32 0.0, %v561
    %v563 = vpop.f32.mrb[0].mxu0
    %564 = vmatprep.mubr.bf16.mxu0 0
    %565 = vmatmul.mubr.bf16.gmra.mrb[0].mxu0 %v450
    %v566 = vpop.f32.mrb[0].mxu0
    %v567 = vadd.f32 0.0, %v566
    %v568 = vpop.f32.mrb[0].mxu0
    %v569 = vpop.f32.mrb[0].mxu0
    %v570 = vadd.f32 0.0, %v569
    %v571 = vpop.f32.mrb[0].mxu0
    %572 = vmatprep.mubr.bf16.mxu0 0
    %573 = vmatmul.mubr.bf16.gmra.mrb[0].mxu0 %v451
    %v574 = vpop.f32.mrb[0].mxu0
    %v575 = vadd.f32 0.0, %v574
    %v576 = vpop.f32.mrb[0].mxu0
    %v577 = vpop.f32.mrb[0].mxu0
    %v578 = vadd.f32 0.0, %v577
    %v579 = vpop.f32.mrb[0].mxu0
    %580 = vmatprep.mubr.bf16.mxu0 0
    %581 = vmatmul.mubr.bf16.gmra.mrb[0].mxu0 %v452
    %v582 = vpop.f32.mrb[0].mxu0
    %v583 = vadd.f32 0.0, %v582
    %v584 = vpop.f32.mrb[0].mxu0
    %v585 = vpop.f32.mrb[0].mxu0
    %v586 = vadd.f32 0.0, %v585
    %v587 = vpop.f32.mrb[0].mxu0
    %588 = vmatprep.mubr.bf16.mxu0 0
    %589 = vmatmul.mubr.bf16.gmra.mrb[0].mxu0 %v453
    %v590 = vpop.f32.mrb[0].mxu0
    %v591 = vadd.f32 0.0, %v590
    %v592 = vpop.f32.mrb[0].mxu0
    %v593 = vpop.f32.mrb[0].mxu0
    %v594 = vadd.f32 0.0, %v593
    %v595 = vpop.f32.mrb[0].mxu0
    %596 = vmatprep.mubr.bf16.mxu0 0
    %597 = vmatmul.mubr.bf16.gmra.mrb[0].mxu0 %v454
    %v598 = vpop.f32.mrb[0].mxu0
    %v599 = vadd.f32 0.0, %v598
    %v600 = vpop.f32.mrb[0].mxu0
    %v601 = vpop.f32.mrb[0].mxu0
    %v602 = vadd.f32 0.0, %v601
    %v603 = vpop.f32.mrb[0].mxu0
    %604 = vmatprep.mubr.bf16.mxu0 0
    %605 = vmatmul.mubr.bf16.gmra.mrb[0].mxu0 %v455
    %v606 = vpop.f32.mrb[0].mxu0
    %v607 = vadd.f32 0.0, %v606
    %v608 = vpop.f32.mrb[0].mxu0
    %v609 = vpop.f32.mrb[0].mxu0
    %v610 = vadd.f32 0.0, %v609
    %v611 = vpop.f32.mrb[0].mxu0
    %612 = vmatprep.mubr.bf16.mxu0 0
    %613 = vmatmul.mubr.bf16.gmra.mrb[0].mxu0 %v456
    %v614 = vpop.f32.mrb[0].mxu0
    %v615 = vadd.f32 0.0, %v614
    %v616 = vpop.f32.mrb[0].mxu0
    %v617 = vpop.f32.mrb[0].mxu0
    %v618 = vadd.f32 0.0, %v617
    %v619 = vpop.f32.mrb[0].mxu0
    %620 = vdwg.mxu0
    %v621 = vpack.c.bf16 %v562, %v559
    %v622 = vpack.c.bf16 %v570, %v567
    %v623 = vpack.c.bf16 %v578, %v575
    %v624 = vpack.c.bf16 %v586, %v583
    %v625 = vpack.c.bf16 %v594, %v591
    %v626 = vpack.c.bf16 %v602, %v599
    %v627 = vpack.c.bf16 %v610, %v607
    %v628 = vpack.c.bf16 %v618, %v615
    %v630 = vlaneseq
    %v631 = vshrl.u32 %v630, 7
    %v632 = vsub.s32 0, %v631
    %v633 = vrot.slane %v475, %v632
    %635 = vmatprep.subr.bf16.mxu0 0
    %636 = vmatpush1.bf16.msra.mxu0 %v621
    %637 = vmatprep.subr.bf16.mxu0 0
    %638 = vmatpush1.bf16.msra.mxu0 %v622
    %639 = vmatprep.subr.bf16.mxu0 0
    %640 = vmatpush1.bf16.msra.mxu0 %v623
    %641 = vmatprep.subr.bf16.mxu0 0
    %642 = vmatpush1.bf16.msra.mxu0 %v624
    %643 = vmatprep.subr.bf16.mxu0 0
    %644 = vmatpush1.bf16.msra.mxu0 %v625
    %645 = vmatprep.subr.bf16.mxu0 0
    %646 = vmatpush1.bf16.msra.mxu0 %v626
    %647 = vmatprep.subr.bf16.mxu0 0
    %648 = vmatpush1.bf16.msra.mxu0 %v627
    %649 = vmatprep.subr.bf16.mxu0 0
    %650 = vmatpush1.bf16.msra.mxu0 %v628
    %651 = vmatprep.subr.bf16.mxu0 0
    %652 = vmatpush1.bf16.msra.mxu0 0
    %653 = vmatprep.subr.bf16.mxu0 0
    %654 = vmatpush1.bf16.msra.mxu0 0
    %655 = vmatprep.subr.bf16.mxu0 0
    %656 = vmatpush1.bf16.msra.mxu0 0
    %657 = vmatprep.subr.bf16.mxu0 0
    %658 = vmatpush1.bf16.msra.mxu0 0
    %659 = vmatprep.subr.bf16.mxu0 0
    %660 = vmatpush1.bf16.msra.mxu0 0
    %661 = vmatprep.subr.bf16.mxu0 0
    %662 = vmatpush1.bf16.msra.mxu0 0
    %663 = vmatprep.subr.bf16.mxu0 0
    %664 = vmatpush1.bf16.msra.mxu0 0
    %665 = vmatprep.subr.bf16.mxu0 0
    %666 = vmatpush1.bf16.msra.mxu0 0
    %667 = vmatprep.mubr.bf16.mxu0 0
    %668 = vmatmul.mubr.bf16.gmra.mrb[0].mxu0 %v320
    %v669 = vpop.f32.mrb[0].mxu0
    %v670 = vadd.f32 %v633, %v669
    %v671 = vpop.f32.mrb[0].mxu0
    %v672 = vpop.f32.mrb[0].mxu0
    %v673 = vadd.f32 %v633, %v672
    %v674 = vpop.f32.mrb[0].mxu0
    %675 = vmatprep.mubr.bf16.mxu0 0
    %676 = vmatmul.mubr.bf16.gmra.mrb[0].mxu0 %v321
    %v677 = vpop.f32.mrb[0].mxu0
    %v678 = vadd.f32 %v633, %v677
    %v679 = vpop.f32.mrb[0].mxu0
    %v680 = vpop.f32.mrb[0].mxu0
    %v681 = vadd.f32 %v633, %v680
    %v682 = vpop.f32.mrb[0].mxu0
    %683 = vmatprep.mubr.bf16.mxu0 0
    %684 = vmatmul.mubr.bf16.gmra.mrb[0].mxu0 %v322
    %v685 = vpop.f32.mrb[0].mxu0
    %v686 = vadd.f32 %v633, %v685
    %v687 = vpop.f32.mrb[0].mxu0
    %v688 = vpop.f32.mrb[0].mxu0
    %v689 = vadd.f32 %v633, %v688
    %v690 = vpop.f32.mrb[0].mxu0
    %691 = vmatprep.mubr.bf16.mxu0 0
    %692 = vmatmul.mubr.bf16.gmra.mrb[0].mxu0 %v323
    %v693 = vpop.f32.mrb[0].mxu0
    %v694 = vadd.f32 %v633, %v693
    %v695 = vpop.f32.mrb[0].mxu0
    %v696 = vpop.f32.mrb[0].mxu0
    %v697 = vadd.f32 %v633, %v696
    %v698 = vpop.f32.mrb[0].mxu0
    %699 = vmatprep.mubr.bf16.mxu0 0
    %700 = vmatmul.mubr.bf16.gmra.mrb[0].mxu0 %v324
    %v701 = vpop.f32.mrb[0].mxu0
    %v702 = vadd.f32 %v633, %v701
    %v703 = vpop.f32.mrb[0].mxu0
    %v704 = vpop.f32.mrb[0].mxu0
    %v705 = vadd.f32 %v633, %v704
    %v706 = vpop.f32.mrb[0].mxu0
    %707 = vmatprep.mubr.bf16.mxu0 0
    %708 = vmatmul.mubr.bf16.gmra.mrb[0].mxu0 %v325
    %v709 = vpop.f32.mrb[0].mxu0
    %v710 = vadd.f32 %v633, %v709
    %v711 = vpop.f32.mrb[0].mxu0
    %v712 = vpop.f32.mrb[0].mxu0
    %v713 = vadd.f32 %v633, %v712
    %v714 = vpop.f32.mrb[0].mxu0
    %715 = vmatprep.mubr.bf16.mxu0 0
    %716 = vmatmul.mubr.bf16.gmra.mrb[0].mxu0 %v326
    %v717 = vpop.f32.mrb[0].mxu0
    %v718 = vadd.f32 %v633, %v717
    %v719 = vpop.f32.mrb[0].mxu0
    %v720 = vpop.f32.mrb[0].mxu0
    %v721 = vadd.f32 %v633, %v720
    %v722 = vpop.f32.mrb[0].mxu0
    %723 = vmatprep.mubr.bf16.mxu0 0
    %724 = vmatmul.mubr.bf16.gmra.mrb[0].mxu0 %v327
    %v725 = vpop.f32.mrb[0].mxu0
    %v726 = vadd.f32 %v633, %v725
    %v727 = vpop.f32.mrb[0].mxu0
    %v728 = vpop.f32.mrb[0].mxu0
    %v729 = vadd.f32 %v633, %v728
    %v730 = vpop.f32.mrb[0].mxu0
    %731 = vdwg.mxu0
    %v732 = vmax.f32 %v670, 0.0
    %v733 = vmax.f32 %v673, 0.0
    %v734 = vmax.f32 %v678, 0.0
    %v735 = vmax.f32 %v681, 0.0
    %v736 = vmax.f32 %v686, 0.0
    %v737 = vmax.f32 %v689, 0.0
    %v738 = vmax.f32 %v694, 0.0
    %v739 = vmax.f32 %v697, 0.0
    %v740 = vmax.f32 %v702, 0.0
    %v741 = vmax.f32 %v705, 0.0
    %v742 = vmax.f32 %v710, 0.0
    %v743 = vmax.f32 %v713, 0.0
    %v744 = vmax.f32 %v718, 0.0
    %v745 = vmax.f32 %v721, 0.0
    %v746 = vmax.f32 %v726, 0.0
    %v747 = vmax.f32 %v729, 0.0
    %v748 = vpack.c.bf16 %v733, %v732
    %v749 = vpack.c.bf16 %v735, %v734
    %v750 = vpack.c.bf16 %v737, %v736
    %v751 = vpack.c.bf16 %v739, %v738
    %v752 = vpack.c.bf16 %v741, %v740
    %v753 = vpack.c.bf16 %v743, %v742
    %v754 = vpack.c.bf16 %v745, %v744
    %v755 = vpack.c.bf16 %v747, %v746
    %s756 = scalar_lea.vmem [#allocation2], 128
    %v757 = vld [vmem:[%s756] sm:$0xf]
    %v758 = vld [vmem:[%s756 + $0x4] sm:$0xf]
    %v759 = vld [vmem:[%s756 + $0x8] sm:$0xf]
    %v760 = vld [vmem:[%s756 + $0xc] sm:$0xf]
    %v761 = vld [vmem:[%s756 + $0x10] sm:$0xf]
    %v762 = vld [vmem:[%s756 + $0x14] sm:$0xf]
    %v763 = vld [vmem:[%s756 + $0x18] sm:$0xf]
    %v764 = vld [vmem:[%s756 + $0x1c] sm:$0xf]
    %v765 = vld [vmem:[%s756 + $0x20] sm:$0xf]
    %v766 = vld [vmem:[%s756 + $0x24] sm:$0xf]
    %v767 = vld [vmem:[%s756 + $0x28] sm:$0xf]
    %v768 = vld [vmem:[%s756 + $0x2c] sm:$0xf]
    %v769 = vld [vmem:[%s756 + $0x30] sm:$0xf]
    %v770 = vld [vmem:[%s756 + $0x34] sm:$0xf]
    %v771 = vld [vmem:[%s756 + $0x38] sm:$0xf]
    %v772 = vld [vmem:[%s756 + $0x3c] sm:$0xf]
    %s773 = scalar_lea.vmem %s3, 2
    %v774 = vld [vmem:[%s773] sm:$0x1]
    %v791 = vunpack.c.l.b16 %v757
    %v792 = vunpack.c.l.b16 %v758
    %v793 = vunpack.c.l.b16 %v759
    %v794 = vunpack.c.l.b16 %v760
    %v795 = vunpack.c.l.b16 %v761
    %v796 = vunpack.c.l.b16 %v762
    %v797 = vunpack.c.l.b16 %v763
    %v798 = vunpack.c.l.b16 %v764
    %v799 = vunpack.c.l.b16 %v765
    %v800 = vunpack.c.l.b16 %v766
    %v801 = vunpack.c.l.b16 %v767
    %v802 = vunpack.c.l.b16 %v768
    %v803 = vunpack.c.l.b16 %v769
    %v804 = vunpack.c.l.b16 %v770
    %v805 = vunpack.c.l.b16 %v771
    %v806 = vunpack.c.l.b16 %v772
    %v807 = vpack.c.b16 %v792, %v791
    %v808 = vpack.c.b16 %v794, %v793
    %v809 = vpack.c.b16 %v796, %v795
    %v810 = vpack.c.b16 %v798, %v797
    %v811 = vpack.c.b16 %v800, %v799
    %v812 = vpack.c.b16 %v802, %v801
    %v813 = vpack.c.b16 %v804, %v803
    %v814 = vpack.c.b16 %v806, %v805
    %823 = vmatprep.subr.bf16.mxu0 0
    %824 = vmatpush1.bf16.msra.mxu0 %v807
    %825 = vmatprep.subr.bf16.mxu0 0
    %826 = vmatpush1.bf16.msra.mxu0 %v808
    %827 = vmatprep.subr.bf16.mxu0 0
    %828 = vmatpush1.bf16.msra.mxu0 %v809
    %829 = vmatprep.subr.bf16.mxu0 0
    %830 = vmatpush1.bf16.msra.mxu0 %v810
    %831 = vmatprep.subr.bf16.mxu0 0
    %832 = vmatpush1.bf16.msra.mxu0 %v811
    %833 = vmatprep.subr.bf16.mxu0 0
    %834 = vmatpush1.bf16.msra.mxu0 %v812
    %835 = vmatprep.subr.bf16.mxu0 0
    %836 = vmatpush1.bf16.msra.mxu0 %v813
    %837 = vmatprep.subr.bf16.mxu0 0
    %838 = vmatpush1.bf16.msra.mxu0 %v814
    %839 = vmatprep.subr.bf16.mxu0 0
    %840 = vmatpush1.bf16.msra.mxu0 0
    %841 = vmatprep.subr.bf16.mxu0 0
    %842 = vmatpush1.bf16.msra.mxu0 0
    %843 = vmatprep.subr.bf16.mxu0 0
    %844 = vmatpush1.bf16.msra.mxu0 0
    %845 = vmatprep.subr.bf16.mxu0 0
    %846 = vmatpush1.bf16.msra.mxu0 0
    %847 = vmatprep.subr.bf16.mxu0 0
    %848 = vmatpush1.bf16.msra.mxu0 0
    %849 = vmatprep.subr.bf16.mxu0 0
    %850 = vmatpush1.bf16.msra.mxu0 0
    %851 = vmatprep.subr.bf16.mxu0 0
    %852 = vmatpush1.bf16.msra.mxu0 0
    %853 = vmatprep.subr.bf16.mxu0 0
    %854 = vmatpush1.bf16.msra.mxu0 0
    %855 = vmatprep.mubr.bf16.mxu0 0
    %856 = vmatmul.mubr.bf16.gmra.mrb[0].mxu0 %v748
    %v857 = vpop.f32.mrb[0].mxu0
    %v858 = vadd.f32 0.0, %v857
    %v859 = vpop.f32.mrb[0].mxu0
    %v860 = vpop.f32.mrb[0].mxu0
    %v861 = vadd.f32 0.0, %v860
    %v862 = vpop.f32.mrb[0].mxu0
    %863 = vmatprep.mubr.bf16.mxu0 0
    %864 = vmatmul.mubr.bf16.gmra.mrb[0].mxu0 %v749
    %v865 = vpop.f32.mrb[0].mxu0
    %v866 = vadd.f32 0.0, %v865
    %v867 = vpop.f32.mrb[0].mxu0
    %v868 = vpop.f32.mrb[0].mxu0
    %v869 = vadd.f32 0.0, %v868
    %v870 = vpop.f32.mrb[0].mxu0
    %871 = vmatprep.mubr.bf16.mxu0 0
    %872 = vmatmul.mubr.bf16.gmra.mrb[0].mxu0 %v750
    %v873 = vpop.f32.mrb[0].mxu0
    %v874 = vadd.f32 0.0, %v873
    %v875 = vpop.f32.mrb[0].mxu0
    %v876 = vpop.f32.mrb[0].mxu0
    %v877 = vadd.f32 0.0, %v876
    %v878 = vpop.f32.mrb[0].mxu0
    %879 = vmatprep.mubr.bf16.mxu0 0
    %880 = vmatmul.mubr.bf16.gmra.mrb[0].mxu0 %v751
    %v881 = vpop.f32.mrb[0].mxu0
    %v882 = vadd.f32 0.0, %v881
    %v883 = vpop.f32.mrb[0].mxu0
    %v884 = vpop.f32.mrb[0].mxu0
    %v885 = vadd.f32 0.0, %v884
    %v886 = vpop.f32.mrb[0].mxu0
    %887 = vmatprep.mubr.bf16.mxu0 0
    %888 = vmatmul.mubr.bf16.gmra.mrb[0].mxu0 %v752
    %v889 = vpop.f32.mrb[0].mxu0
    %v890 = vadd.f32 0.0, %v889
    %v891 = vpop.f32.mrb[0].mxu0
    %v892 = vpop.f32.mrb[0].mxu0
    %v893 = vadd.f32 0.0, %v892
    %v894 = vpop.f32.mrb[0].mxu0
    %895 = vmatprep.mubr.bf16.mxu0 0
    %896 = vmatmul.mubr.bf16.gmra.mrb[0].mxu0 %v753
    %v897 = vpop.f32.mrb[0].mxu0
    %v898 = vadd.f32 0.0, %v897
    %v899 = vpop.f32.mrb[0].mxu0
    %v900 = vpop.f32.mrb[0].mxu0
    %v901 = vadd.f32 0.0, %v900
    %v902 = vpop.f32.mrb[0].mxu0
    %903 = vmatprep.mubr.bf16.mxu0 0
    %904 = vmatmul.mubr.bf16.gmra.mrb[0].mxu0 %v754
    %v905 = vpop.f32.mrb[0].mxu0
    %v906 = vadd.f32 0.0, %v905
    %v907 = vpop.f32.mrb[0].mxu0
    %v908 = vpop.f32.mrb[0].mxu0
    %v909 = vadd.f32 0.0, %v908
    %v910 = vpop.f32.mrb[0].mxu0
    %911 = vmatprep.mubr.bf16.mxu0 0
    %912 = vmatmul.mubr.bf16.gmra.mrb[0].mxu0 %v755
    %v913 = vpop.f32.mrb[0].mxu0
    %v914 = vadd.f32 0.0, %v913
    %v915 = vpop.f32.mrb[0].mxu0
    %v916 = vpop.f32.mrb[0].mxu0
    %v917 = vadd.f32 0.0, %v916
    %v918 = vpop.f32.mrb[0].mxu0
    %919 = vdwg.mxu0
    %v920 = vpack.c.bf16 %v861, %v858
    %v921 = vpack.c.bf16 %v869, %v866
    %v922 = vpack.c.bf16 %v877, %v874
    %v923 = vpack.c.bf16 %v885, %v882
    %v924 = vpack.c.bf16 %v893, %v890
    %v925 = vpack.c.bf16 %v901, %v898
    %v926 = vpack.c.bf16 %v909, %v906
    %v927 = vpack.c.bf16 %v917, %v914
    %v929 = vlaneseq
    %v930 = vshrl.u32 %v929, 7
    %v931 = vsub.s32 0, %v930
    %v932 = vrot.slane %v774, %v931
    %934 = vmatprep.subr.bf16.mxu0 0
    %935 = vmatpush1.bf16.msra.mxu0 %v920
    %936 = vmatprep.subr.bf16.mxu0 0
    %937 = vmatpush1.bf16.msra.mxu0 %v921
    %938 = vmatprep.subr.bf16.mxu0 0
    %939 = vmatpush1.bf16.msra.mxu0 %v922
    %940 = vmatprep.subr.bf16.mxu0 0
    %941 = vmatpush1.bf16.msra.mxu0 %v923
    %942 = vmatprep.subr.bf16.mxu0 0
    %943 = vmatpush1.bf16.msra.mxu0 %v924
    %944 = vmatprep.subr.bf16.mxu0 0
    %945 = vmatpush1.bf16.msra.mxu0 %v925
    %946 = vmatprep.subr.bf16.mxu0 0
    %947 = vmatpush1.bf16.msra.mxu0 %v926
    %948 = vmatprep.subr.bf16.mxu0 0
    %949 = vmatpush1.bf16.msra.mxu0 %v927
    %950 = vmatprep.subr.bf16.mxu0 0
    %951 = vmatpush1.bf16.msra.mxu0 0
    %952 = vmatprep.subr.bf16.mxu0 0
    %953 = vmatpush1.bf16.msra.mxu0 0
    %954 = vmatprep.subr.bf16.mxu0 0
    %955 = vmatpush1.bf16.msra.mxu0 0
    %956 = vmatprep.subr.bf16.mxu0 0
    %957 = vmatpush1.bf16.msra.mxu0 0
    %958 = vmatprep.subr.bf16.mxu0 0
    %959 = vmatpush1.bf16.msra.mxu0 0
    %960 = vmatprep.subr.bf16.mxu0 0
    %961 = vmatpush1.bf16.msra.mxu0 0
    %962 = vmatprep.subr.bf16.mxu0 0
    %963 = vmatpush1.bf16.msra.mxu0 0
    %964 = vmatprep.subr.bf16.mxu0 0
    %965 = vmatpush1.bf16.msra.mxu0 0
    %966 = vmatprep.mubr.bf16.mxu0 0
    %967 = vmatmul.mubr.bf16.gmra.mrb[0].mxu0 %v320
    %v968 = vpop.f32.mrb[0].mxu0
    %v969 = vadd.f32 %v932, %v968
    %v970 = vpop.f32.mrb[0].mxu0
    %v971 = vpop.f32.mrb[0].mxu0
    %v972 = vadd.f32 %v932, %v971
    %v973 = vpop.f32.mrb[0].mxu0
    %974 = vmatprep.mubr.bf16.mxu0 0
    %975 = vmatmul.mubr.bf16.gmra.mrb[0].mxu0 %v321
    %v976 = vpop.f32.mrb[0].mxu0
    %v977 = vadd.f32 %v932, %v976
    %v978 = vpop.f32.mrb[0].mxu0
    %v979 = vpop.f32.mrb[0].mxu0
    %v980 = vadd.f32 %v932, %v979
    %v981 = vpop.f32.mrb[0].mxu0
    %982 = vmatprep.mubr.bf16.mxu0 0
    %983 = vmatmul.mubr.bf16.gmra.mrb[0].mxu0 %v322
    %v984 = vpop.f32.mrb[0].mxu0
    %v985 = vadd.f32 %v932, %v984
    %v986 = vpop.f32.mrb[0].mxu0
    %v987 = vpop.f32.mrb[0].mxu0
    %v988 = vadd.f32 %v932, %v987
    %v989 = vpop.f32.mrb[0].mxu0
    %990 = vmatprep.mubr.bf16.mxu0 0
    %991 = vmatmul.mubr.bf16.gmra.mrb[0].mxu0 %v323
    %v992 = vpop.f32.mrb[0].mxu0
    %v993 = vadd.f32 %v932, %v992
    %v994 = vpop.f32.mrb[0].mxu0
    %v995 = vpop.f32.mrb[0].mxu0
    %v996 = vadd.f32 %v932, %v995
    %v997 = vpop.f32.mrb[0].mxu0
    %998 = vmatprep.mubr.bf16.mxu0 0
    %999 = vmatmul.mubr.bf16.gmra.mrb[0].mxu0 %v324
    %v1000 = vpop.f32.mrb[0].mxu0
    %v1001 = vadd.f32 %v932, %v1000
    %v1002 = vpop.f32.mrb[0].mxu0
    %v1003 = vpop.f32.mrb[0].mxu0
    %v1004 = vadd.f32 %v932, %v1003
    %v1005 = vpop.f32.mrb[0].mxu0
    %1006 = vmatprep.mubr.bf16.mxu0 0
    %1007 = vmatmul.mubr.bf16.gmra.mrb[0].mxu0 %v325
    %v1008 = vpop.f32.mrb[0].mxu0
    %v1009 = vadd.f32 %v932, %v1008
    %v1010 = vpop.f32.mrb[0].mxu0
    %v1011 = vpop.f32.mrb[0].mxu0
    %v1012 = vadd.f32 %v932, %v1011
    %v1013 = vpop.f32.mrb[0].mxu0
    %1014 = vmatprep.mubr.bf16.mxu0 0
    %1015 = vmatmul.mubr.bf16.gmra.mrb[0].mxu0 %v326
    %v1016 = vpop.f32.mrb[0].mxu0
    %v1017 = vadd.f32 %v932, %v1016
    %v1018 = vpop.f32.mrb[0].mxu0
    %v1019 = vpop.f32.mrb[0].mxu0
    %v1020 = vadd.f32 %v932, %v1019
    %v1021 = vpop.f32.mrb[0].mxu0
    %1022 = vmatprep.mubr.bf16.mxu0 0
    %1023 = vmatmul.mubr.bf16.gmra.mrb[0].mxu0 %v327
    %v1024 = vpop.f32.mrb[0].mxu0
    %v1025 = vadd.f32 %v932, %v1024
    %v1026 = vpop.f32.mrb[0].mxu0
    %v1027 = vpop.f32.mrb[0].mxu0
    %v1028 = vadd.f32 %v932, %v1027
    %v1029 = vpop.f32.mrb[0].mxu0
    %1030 = vdwg.mxu0
    %1031 = vst [vmem:[%s4] sm:$0xff] %v969
    %1032 = vst [vmem:[%s4 + $0x8] sm:$0xff] %v972
    %1033 = vst [vmem:[%s4 + $0x10] sm:$0xff] %v977
    %1034 = vst [vmem:[%s4 + $0x18] sm:$0xff] %v980
    %1035 = vst [vmem:[%s4 + $0x20] sm:$0xff] %v985
    %1036 = vst [vmem:[%s4 + $0x28] sm:$0xff] %v988
    %1037 = vst [vmem:[%s4 + $0x30] sm:$0xff] %v993
    %1038 = vst [vmem:[%s4 + $0x38] sm:$0xff] %v996
    %1039 = vst [vmem:[%s4 + $0x40] sm:$0xff] %v1001
    %1040 = vst [vmem:[%s4 + $0x48] sm:$0xff] %v1004
    %1041 = vst [vmem:[%s4 + $0x50] sm:$0xff] %v1009
    %1042 = vst [vmem:[%s4 + $0x58] sm:$0xff] %v1012
    %1043 = vst [vmem:[%s4 + $0x60] sm:$0xff] %v1017
    %1044 = vst [vmem:[%s4 + $0x68] sm:$0xff] %v1020
    %1045 = vst [vmem:[%s4 + $0x70] sm:$0xff] %v1025
    %1046 = vst [vmem:[%s4 + $0x78] sm:$0xff] %v1028
    // Predicated region
    $region22: #{_gcn_forward_impl.1} parent=1 // pred_check
      _
    $region23: #{_gcn_forward_impl.1} parent=1 // pred_check_branch
      %1048 = sbr.rel (0) target = $region25
    $region24: #{_gcn_forward_impl.1} parent=1 // pred_region
      _
    $region25: #{_gcn_forward_impl.1} parent=1 // pred_fallthru
      _
    // Predicated region
    $region26: #{_gcn_forward_impl.1} parent=1 // pred_check
      _
    $region27: #{_gcn_forward_impl.1} parent=1 // pred_check_branch
      %1050 = sbr.rel (0) target = $region29
    $region28: #{_gcn_forward_impl.1} parent=1 // pred_region
      _
    $region29: #{_gcn_forward_impl.1} parent=1 // pred_fallthru
      _
    %1051 = vsyncpa [#allocation3], 1

</llo_original>
